<compile_context>
chip_gen: v7x
topology: tpu7x:2x2x1
jax: 0.10.0
libtpu: 0.0.40
codegen_flags: <defaults>
</compile_context>

<pallas_src>
import functools

import jax
import jax.numpy as jnp
from jax.experimental import pallas as pl
from jax.experimental.pallas import tpu as pltpu

# RoBERTa special-token ids (roberta-base vocabulary)
CLS_ID = 0
PAD_ID = 1
EOS_ID = 2
MASK_ID = 50264


def _prompt_kernel(ids_ref, mask_ref, mlm_pos_ref):
    ids = ids_ref[...]                                   # [TB, L] int32
    L = ids.shape[1]

    # attention mask: 1 where token != <pad>, else 0
    mask_ref[...] = (ids != PAD_ID).astype(mask_ref.dtype)

    # mlm_pos: first position where id == <mask>  (nonzero()[0] equivalent).
    # Sentinel L if absent (inputs are assumed to always contain one <mask>).
    col = jax.lax.broadcasted_iota(jnp.int32, ids.shape, 1)      # [TB, L]
    pos = jnp.min(jnp.where(ids == MASK_ID, col, L), axis=1)     # [TB]
    # Lane-dense store: (1, 1, TB) block instead of a (TB, 1) column of
    # 1-lane masked stores; sublane->lane relayout runs on the idle XLU.
    mlm_pos_ref[...] = pos.reshape(mlm_pos_ref.shape).astype(jnp.int32)


def _round_up(x, m):
    return ((x + m - 1) // m) * m


def _choose_block_rows(B, L, mask_bytes):
    """Pick the row tile TB.

    Target ~4 MiB ids input block (measured Pallas data: 1-4 MiB tiles reach
    ~85-86% of HBM roofline), capped so the double-buffered pipelined
    footprint (ids in + mask out + pos out) stays within ~20 MiB — under the
    32 MiB vmem_limit we request and well under v7x's 64 MiB physical VMEM.
    """
    target = max(32, (4 << 20) // (4 * L))            # ~4 MiB ids block
    per_row = 2 * (4 * L + mask_bytes * L + 4)        # 2 buffers x bytes/row
    cap = max(32, (20 << 20) // per_row)
    tb = max(32, (min(target, cap) // 32) * 32)       # multiple of 32 (int8 packing)
    if B <= 64:
        # Tiny batch: one block whose row dim equals the full array dim.
        return B
    # Keep >=2 grid steps so both v7x TensorCores get work ("parallel" axis);
    # harmless extra ~0.35us on 1-TC chips (v5e/v6e).
    half = max(32, _round_up(-(-B // 2), 32))
    return min(tb, half)


@functools.partial(jax.jit, static_argnames=("mask_dtype", "block_rows"))
def prompt_forward(ids, *, mask_dtype=jnp.int8, block_rows=None):
    """Pallas equivalent of `prompt.forward` on pre-tokenized ids.

    ids : [B, L] token ids. Prefer int32 — other integer dtypes force one
          extra HBM round-trip cast before the kernel.

    Returns (ids, masks, mlm_tokens, mlm_pos):
      ids        : the caller's array, passed through untouched
      masks      : [B, L] mask_dtype (default int8)
      mlm_tokens : [B, 1] int32, constant <mask> id
      mlm_pos    : [B, 1] int32, first <mask> position (sentinel L if absent)
    """
    B, L = ids.shape
    ids_i32 = ids if ids.dtype == jnp.int32 else ids.astype(jnp.int32)

    mask_bytes = jnp.dtype(mask_dtype).itemsize
    if block_rows is not None:
        TB = max(1, min(block_rows, B))
    else:
        TB = _choose_block_rows(B, L, mask_bytes)
    num_blocks = -(-B // TB)   # partial final block is clipped by Pallas

    masks, mlm_pos_blk = pl.pallas_call(
        _prompt_kernel,
        out_shape=(
            jax.ShapeDtypeStruct((B, L), mask_dtype),              # masks
            jax.ShapeDtypeStruct((num_blocks, 1, TB), jnp.int32),  # mlm_pos (lane-dense)
        ),
        grid=(num_blocks,),
        in_specs=[pl.BlockSpec((TB, L), lambda i: (i, 0))],
        out_specs=(
            pl.BlockSpec((TB, L), lambda i: (i, 0)),
            pl.BlockSpec((1, 1, TB), lambda i: (i, 0, 0)),
        ),
        compiler_params=pltpu.CompilerParams(
            dimension_semantics=("parallel",),
            vmem_limit_bytes=32 << 20,
        ),
    )(ids_i32)

    # Tiny wrapper-side fixups (a few KiB at most).
    mlm_pos = mlm_pos_blk.reshape(num_blocks * TB)[:B, None]
    mlm_tokens = jnp.full((B, 1), MASK_ID, dtype=jnp.int32)
    return ids, masks, mlm_tokens, mlm_pos


def build_synthetic_ids(key, batch=2, seq_len=128):
    """Deterministic 'tokenized' batch: <s> ... <mask> ... </s> <pad>*."""
    k_body, k_len, k_maskpos = jax.random.split(key, 3)
    # random "word" token ids in the regular vocab range [3, 50000)
    body = jax.random.randint(k_body, (batch, seq_len), 3, 50000, dtype=jnp.int32)
    # per-example real (unpadded) length in [8, seq_len // 2)
    lengths = jax.random.randint(k_len, (batch,), 8, seq_len // 2, dtype=jnp.int32)
    col = jnp.arange(seq_len, dtype=jnp.int32)[None, :]
    ids = jnp.where(col < lengths[:, None], body, PAD_ID)
    ids = ids.at[:, 0].set(CLS_ID)
    rows = jnp.arange(batch)
    ids = ids.at[rows, lengths - 1].set(EOS_ID)             # </s>
    # one <mask> token strictly inside the sequence
    mask_pos = 1 + jax.random.randint(k_maskpos, (batch,), 0, 6, dtype=jnp.int32)
    ids = ids.at[rows, mask_pos].set(MASK_ID)
    return ids


def _check(ids_in, outs):
    ids, masks, mlm_tokens, mlm_pos = outs
    B, L = ids_in.shape
    ref_mask = (ids_in != PAD_ID).astype(masks.dtype)
    ref_pos = jnp.argmax(ids_in == MASK_ID, axis=1).astype(jnp.int32)[:, None]
    assert ids.shape == (B, L) and masks.shape == (B, L)
    assert mlm_tokens.shape == (B, 1) and mlm_pos.shape == (B, 1)
    assert bool(jnp.all(ids == ids_in))
    assert bool(jnp.all(masks == ref_mask))
    assert bool(jnp.all(mlm_tokens == MASK_ID))
    assert bool(jnp.all(mlm_pos == ref_pos))


if __name__ == "__main__":
    key = jax.random.PRNGKey(0)

    # Small batch (single sub-tile block).
    ids_in = build_synthetic_ids(key, batch=2, seq_len=128)
    outs = prompt_forward(ids_in)
    jax.block_until_ready(outs)
    _check(ids_in, outs)

    # Non-divisible batch: exercises the cdiv grid with a clipped final block
    # and the multi-step "parallel" row axis (TB=64 -> 2 grid steps).
    ids_in2 = build_synthetic_ids(jax.random.PRNGKey(1), batch=70, seq_len=128)
    outs2 = prompt_forward(ids_in2)
    jax.block_until_ready(outs2)
    _check(ids_in2, outs2)

    print("KERNEL_OK")
</pallas_src>

<mosaic_0001>
module attributes {stable_mosaic.version = 11 : i64} {
  func.func @_prompt_kernel(%arg0: i32, %arg1: memref<2x128xi32, #tpu.memory_space<vmem>>, %arg2: memref<2x128xi8, #tpu.memory_space<vmem>>, %arg3: memref<1x1x2xi32, #tpu.memory_space<vmem>>) attributes {dimension_semantics = [#tpu.dimension_semantics<parallel>], iteration_bounds = array<i64: 1>, scalar_prefetch = 0 : i64, scratch_operands = 0 : i64, tpu.core_type = #tpu.core_type<tc>, window_params = [{transform_indices = @transform_0, window_bounds = array<i64: 2, 128>}, {transform_indices = @transform_1, window_bounds = array<i64: 2, 128>}, {transform_indices = @transform_2, window_bounds = array<i64: 1, 1, 2>}]} {
    %c0 = arith.constant 0 : index
    %c0_0 = arith.constant 0 : index
    %0 = vector.load %arg1[%c0, %c0_0] : memref<2x128xi32, #tpu.memory_space<vmem>>, vector<2x128xi32>
    %c1_i32 = arith.constant 1 : i32
    %1 = vector.broadcast %c1_i32 : i32 to vector<2x128xi32>
    %2 = arith.cmpi ne, %0, %1 : vector<2x128xi32>
    %3 = arith.extui %2 : vector<2x128xi1> to vector<2x128xi8>
    %c0_1 = arith.constant 0 : index
    %c0_2 = arith.constant 0 : index
    %4 = vector.load %arg2[%c0_1, %c0_2] : memref<2x128xi8, #tpu.memory_space<vmem>>, vector<2x128xi8>
    tpu.vector_store %arg2[%c0_1, %c0_2], %3 {strides = array<i32>} : memref<2x128xi8, #tpu.memory_space<vmem>>, vector<2x128xi8>,
    %5 = tpu.iota {dimensions = array<i32: 1>} : vector<2x128xi32>
    %c50264_i32 = arith.constant 50264 : i32
    %6 = vector.broadcast %c50264_i32 : i32 to vector<2x128xi32>
    %7 = arith.cmpi eq, %0, %6 : vector<2x128xi32>
    %c128_i32 = arith.constant 128 : i32
    %8 = vector.broadcast %c128_i32 : i32 to vector<2x128xi32>
    %9 = arith.select %7, %5, %8 : vector<2x128xi1>, vector<2x128xi32>
    %cst = arith.constant dense<2147483647> : vector<2xi32>
    %10 = vector.multi_reduction <minsi>, %9, %cst [1] : vector<2x128xi32> to vector<2xi32>
    %11 = vector.shape_cast %10 : vector<2xi32> to vector<1x1x2xi32>
    %c0_3 = arith.constant 0 : index
    %c0_4 = arith.constant 0 : index
    %c0_5 = arith.constant 0 : index
    %12 = vector.load %arg3[%c0_3, %c0_4, %c0_5] : memref<1x1x2xi32, #tpu.memory_space<vmem>>, vector<1x1x2xi32>
    tpu.vector_store %arg3[%c0_3, %c0_4, %c0_5], %11 {strides = array<i32>} : memref<1x1x2xi32, #tpu.memory_space<vmem>>, vector<1x1x2xi32>,
    return
  }
  func.func @transform_0(%arg0: i32) -> (i32, i32) {
    %c0_i32 = arith.constant 0 : i32
    %c0_i32_0 = arith.constant 0 : i32
    return %arg0, %c0_i32 : i32, i32
  }
  func.func @transform_1(%arg0: i32) -> (i32, i32) {
    %c0_i32 = arith.constant 0 : i32
    %c0_i32_0 = arith.constant 0 : i32
    return %arg0, %c0_i32 : i32, i32
  }
  func.func @transform_2(%arg0: i32) -> (i32, i32, i32) {
    %c0_i32 = arith.constant 0 : i32
    %c0_i32_0 = arith.constant 0 : i32
    %c0_i32_1 = arith.constant 0 : i32
    return %arg0, %c0_i32, %c0_i32_0 : i32, i32, i32
  }
}

</mosaic_0001>

<llo_original>
// kernel: prompt_forward.1
$region0: #{prompt_forward.1}
  #allocation0 [shape = 'u32[]', space=smem, size = 0x4, offset = 0x4, fixed_abs, tag = 'smem constant byte address 0x4 - core index']
  #allocation1 [shape = 'u32[144,128]{1,0:T(1,128)}', space=vmem, size = 0x12000, scoped, tag = 'internal scratch']
  %s0 = inlined_call_operand.hbm [shape: s32[2,128], index: 0, kind: input, shape index: {}]
  %s1 = inlined_call_operand.hbm [shape: s8[2,128], index: 1, kind: output, shape index: {0}]
  %s2 = inlined_call_operand.hbm [shape: s32[1,1,2], index: 2, kind: output, shape index: {1}]
  %3 = xla_tuple %s1, %s2
  %s4 = sld [smem:[#allocation0]]
  $region26: #{prompt_forward.1} parent=0
    _
  %s6 = ssub.s32 1, %s4
  %s7 = scalar_select 0, %s6, %s4
  $region1: #{prompt_forward.1} parent=0
    #allocation2 [shape = 'u8[1024]{0}', space=vmem, size = 0x400, scoped, tag = 'input window, operand 0, single buffered']
    #allocation3 [shape = 's32[1]{0}', space=sflag, size = 0x4, scoped, tag = 'scoped memory for prompt_forward.1']
    #allocation4 [shape = 's32[1]{0}', space=sflag, size = 0x4, scoped, tag = 'scoped memory for prompt_forward.1']
    #allocation5 [shape = 'u8[512]{0}', space=vmem, size = 0x400, scoped, tag = 'output window, operand 0, single buffered']
    #allocation6 [shape = 'u8[512]{0}', space=vmem, size = 0x400, scoped, tag = 'output window, operand 1, single buffered']
    #allocation7 [shape = 's32[1]{0}', space=sflag, size = 0x4, scoped, tag = 'scoped memory for prompt_forward.1']
    %8 = vsyncpa [#allocation3], 0
    %9 = vsyncpa [#allocation4], 0
    %10 = vsyncpa [#allocation7], 0
    // Predicated region
    $region2: #{prompt_forward.1} parent=1 // pred_check
      _
    $region3: #{prompt_forward.1} parent=1 // pred_check_branch
      %12 = sbr.rel (0) target = $region5
    $region4: #{prompt_forward.1} parent=1 // pred_region
      %s14 = ssub.s32 32, 32
      %15 = vsyncadd [#allocation3], %s14
      %s17 = sshll.u32 [#allocation2], 4
      %s18 = int_to_ptr.vmem [resolvable:$true] %s17
      %20 = dma.hbm_to_vmem [thread:$0]  %s0, 32, %s18, [#allocation3]
    $region5: #{prompt_forward.1} parent=1 // pred_fallthru
      _
    // Predicated region
    $region6: #{prompt_forward.1} parent=1 // pred_check
      _
    $region7: #{prompt_forward.1} parent=1 // pred_check_branch
      %22 = sbr.rel (0) target = $region9
    $region8: #{prompt_forward.1} parent=1 // pred_region
      %23 = dma.done [#allocation3], 32
    $region9: #{prompt_forward.1} parent=1 // pred_fallthru
      _
    %v26 = vld [vmem:[#allocation2] sm:$0x3]
    %vm27 = vcmp.ne.s32.totalorder %v26, 1
    %vm28 = vmpackc.low %vm27, %vm27
    %vm29 = vmpackc.even %vm28, %vm28
    %v30 = vsel %vm29, 16843009, 0
    %vm31 = vcmask 1040384
    %vm32 = vsmask.f32 256
    %vm33 = vmand %vm31, %vm32
    %v34 = vld [vmem:[#allocation5] sm:$0x1]
    %v35 = vsel %vm33, %v30, %v34
    %36 = vst [vmem:[#allocation5] sm:$0x1] %v35
    %v37 = vlaneseq
    %v38 = vand.u32 %v37, 127
    %vm39 = vcmp.eq.s32.totalorder %v26, 50264
    %v40 = vsel %vm39, %v38, 128
    %vm41 = vcmask 1041408
    %v42 = vsel %vm41, %v40, 2147483647
    %v43 = vand.u32 %v42, 65535
    %v44 = vshra.s32 %v42, 16
    %v45 = vcvt.s32.f32 %v43
    %v46 = vcvt.s32.f32 %v44
    %47 = vmin.xlane.f32.xlu0 %v46
    %v48 = vpop.xlane.xlu0 %47
    %vm49 = vcmp.eq.f32.partialorder %v46, %v48
    %v50 = vsel %vm49, %v45, inf
    %51 = vmin.xlane.f32.xlu0 %v50
    %v52 = vpop.xlane.xlu0 %51
    %v53 = vcvt.f32.s32 %v52
    %v54 = vcvt.f32.s32 %v48
    %v55 = vshll.u32 %v54, 16
    %v56 = vadd.s32 %v55, %v53
    %v57 = vlaneseq
    %v58 = vshrl.u32 %v57, 7
    %v59 = vsub.s32 %v38, %v58
    %v60 = vrot.slane %v56, %v59
    %vm61 = vcmask 8192
    %62 = vst.msk [vmem:[#allocation6] sm:$0x1] %vm61, %v60
    // Predicated region
    $region10: #{prompt_forward.1} parent=1 // pred_check
      _
    $region11: #{prompt_forward.1} parent=1 // pred_check_branch
      %64 = sbr.rel (0) target = $region13
    $region12: #{prompt_forward.1} parent=1 // pred_region
      %s66 = ssub.s32 16, 16
      %67 = vsyncadd [#allocation4], %s66
      %s69 = sshll.u32 [#allocation5], 4
      %s70 = int_to_ptr.vmem [resolvable:$true] %s69
      %72 = dma.vmem_to_hbm [thread:$0]  %s70, 16, %s1, [#allocation4]
    $region13: #{prompt_forward.1} parent=1 // pred_fallthru
      _
    // Predicated region
    $region14: #{prompt_forward.1} parent=1 // pred_check
      _
    $region15: #{prompt_forward.1} parent=1 // pred_check_branch
      %74 = sbr.rel (0) target = $region17
    $region16: #{prompt_forward.1} parent=1 // pred_region
      %s76 = ssub.s32 16, 16
      %77 = vsyncadd [#allocation7], %s76
      %s79 = sshll.u32 [#allocation6], 4
      %s80 = int_to_ptr.vmem [resolvable:$true] %s79
      %82 = dma.vmem_to_hbm [thread:$0]  %s80, 16, %s2, [#allocation7]
    $region17: #{prompt_forward.1} parent=1 // pred_fallthru
      _
    // Predicated region
    $region18: #{prompt_forward.1} parent=1 // pred_check
      _
    $region19: #{prompt_forward.1} parent=1 // pred_check_branch
      %84 = sbr.rel (0) target = $region21
    $region20: #{prompt_forward.1} parent=1 // pred_region
      %85 = dma.done [#allocation4], 16
    $region21: #{prompt_forward.1} parent=1 // pred_fallthru
      _
    // Predicated region
    $region22: #{prompt_forward.1} parent=1 // pred_check
      _
    $region23: #{prompt_forward.1} parent=1 // pred_check_branch
      %87 = sbr.rel (0) target = $region25
    $region24: #{prompt_forward.1} parent=1 // pred_region
      %88 = dma.done [#allocation7], 16
    $region25: #{prompt_forward.1} parent=1 // pred_fallthru
      _
    %89 = vsyncpa [#allocation3], 1
    %90 = vsyncpa [#allocation4], 1
    %91 = vsyncpa [#allocation7], 1

</llo_original>
